<compile_context>
chip_gen: v5e
topology: v5e:2x2
jax: 0.10.0
libtpu: 0.0.40
codegen_flags: <defaults>
</compile_context>

<pallas_src>
from functools import lru_cache
from math import sqrt

import numpy as np
import jax
import jax.numpy as jnp
from jax.experimental import pallas as pl
from jax.experimental.pallas import tpu as pltpu


@lru_cache(maxsize=None)
def _hadamard_matrix_np(d: int) -> np.ndarray:
    """Unnormalized Walsh-Hadamard matrix (entries +-1); d must be a power of 2."""
    assert d > 0 and (d & (d - 1)) == 0, "query_dims must be a power of 2"
    h = np.array([[1.0]], dtype=np.float32)
    while h.shape[0] < d:
        h = np.block([[h, h], [h, -h]])
    return h


@lru_cache(maxsize=None)
def _chip_config():
    """(target_lanes, use_bf16_operands, usable_vmem_bytes) for the local TPU."""
    try:
        kind = jax.devices()[0].device_kind.lower()
    except Exception:  # pragma: no cover - defensive
        kind = ""
    wide_mxu = ("v6" in kind) or ("v7" in kind)      # 2x256^2 MXU tile
    use_bf16_operands = "v5" in kind                 # avoid multi-pass f32 MXU on v5e
    try:
        vmem_cap = int(pltpu.get_tpu_info().vmem_capacity_bytes)
    except Exception:
        vmem_cap = (64 << 20) if "v7" in kind else (128 << 20)
    usable_vmem = (vmem_cap * 3) // 4                # ~48 MiB on v7x, ~96 MiB on v5e/v6e
    target_lanes = 256 if wide_mxu else 128
    return target_lanes, use_bf16_operands, usable_vmem


def _fastfood_matrix(B, G, S, P, softmax_temp):
    """Collapse the FastFood pipeline into a single DxD matrix: out = x @ M."""
    D = B.shape[0]
    H = jnp.asarray(_hadamard_matrix_np(D))
    Hperm = H[:, P]                                        # fold the permutation into H
    c = float(sqrt(softmax_temp))
    inv_sqrt_d = float(sqrt(1.0 / D))
    M = (c * B.astype(jnp.float32))[:, None] * Hperm       # diag(c*B) @ H[:,P]
    M = M * G.astype(jnp.float32)[None, :]                 # @ diag(G)
    M = M @ H                                              # @ H
    M = M * (S.astype(jnp.float32) * inv_sqrt_d)[None, :]  # @ diag(S/sqrt(D))
    return M


def _make_fastfood_kernel(cast_operands_to_bf16: bool):
    def kernel(x_ref, m_ref, o_ref):
        x = x_ref[...]
        if cast_operands_to_bf16:
            x = x.astype(jnp.bfloat16)        # M is already bf16 host-side in this mode
        o_ref[...] = jnp.dot(
            x, m_ref[...], preferred_element_type=jnp.float32
        ).astype(o_ref.dtype)
    return kernel


def fastfood_forward(x, B, G, S, P, softmax_temp, *, target_tile_rows=8192):
    """Pallas implementation of FastFoodRandomFeatures.forward."""
    orig_shape = x.shape
    orig_dtype = x.dtype
    D = orig_shape[-1]
    target_lanes, use_bf16, usable_vmem = _chip_config()

    M = _fastfood_matrix(B, G, S, P, softmax_temp)

    xf = x.reshape(-1, D)
    rows = xf.shape[0]

    # ---- lane-dense packing: group independent D-blocks up to the MXU width.
    pack = 1
    if D < target_lanes and target_lanes % D == 0:
        pack = target_lanes // D
    rows_pad = 0
    if pack > 1 and rows % pack:
        # Pad a few zero rows instead of shrinking pack (keeps unmasked full-lane stores).
        rows_pad = pack - rows % pack
        xf = jnp.pad(xf, ((0, rows_pad), (0, 0)))
    DW = pack * D
    rows_p = (rows + rows_pad) // pack
    xp = xf.reshape(rows_p, DW)
    Mb = jnp.kron(jnp.eye(pack, dtype=M.dtype), M) if pack > 1 else M  # block-diagonal
    if use_bf16:
        Mb = Mb.astype(jnp.bfloat16)

    # ---- row-tile sizing from the generation-aware VMEM budget.
    in_bpe = jnp.dtype(xp.dtype).itemsize
    out_bpe = jnp.dtype(orig_dtype).itemsize
    m_bpe = jnp.dtype(Mb.dtype).itemsize
    m_bytes = 2 * DW * DW * m_bpe                 # Mb is constant but still double-buffered
    per_row = 2 * DW * (in_bpe + out_bpe)         # double-buffered input + output tiles
    headroom = 2 << 20
    buffer_budget = usable_vmem - m_bytes - headroom
    if buffer_budget < 8 * per_row:
        # TODO(synk): tile M along K/N for very large query_dims instead of failing.
        raise ValueError(
            f"Folded FastFood matrix ({DW}x{DW}) leaves no room for row tiles in VMEM")
    max_tile = (buffer_budget // per_row) // 8 * 8
    tile_rows = min(int(target_tile_rows), int(max_tile), ((rows_p + 7) // 8) * 8)
    # Keep >=2 roughly balanced grid steps so both v7x TensorCores get work.
    if rows_p >= 16:
        half = (((rows_p + 1) // 2) + 7) // 8 * 8
        tile_rows = min(tile_rows, half)
    tile_rows = max(8, tile_rows)

    grid = (pl.cdiv(rows_p, tile_rows),)

    cost = pl.CostEstimate(
        flops=2 * rows_p * DW * DW,
        transcendentals=0,
        bytes_accessed=rows_p * DW * (in_bpe + out_bpe) + DW * DW * m_bpe,
    )

    out = pl.pallas_call(
        _make_fastfood_kernel(use_bf16),
        out_shape=jax.ShapeDtypeStruct((rows_p, DW), orig_dtype),
        grid_spec=pltpu.PrefetchScalarGridSpec(
            num_scalar_prefetch=0,
            grid=grid,
            in_specs=[
                pl.BlockSpec((tile_rows, DW), lambda i: (i, 0)),  # x row-tile
                pl.BlockSpec((DW, DW), lambda i: (0, 0)),         # folded matrix M
            ],
            out_specs=pl.BlockSpec((tile_rows, DW), lambda i: (i, 0)),
        ),
        compiler_params=pltpu.CompilerParams(
            dimension_semantics=("parallel",),
            vmem_limit_bytes=int(usable_vmem),
        ),
        cost_estimate=cost,
    )(xp, Mb)

    out = out.reshape(rows_p * pack, D)
    if rows_pad:
        out = out[:rows]
    return out.reshape(orig_shape)


def fastfood_reference(x, B, G, S, P, softmax_temp):
    """Pure-JAX reference mirroring the PyTorch forward, for correctness check."""
    D = x.shape[-1]
    Hmat = jnp.asarray(_hadamard_matrix_np(D))
    x_shape = x.shape
    xs = (x * sqrt(softmax_temp)).reshape(-1, D)
    Bx = xs * B
    HBx = Bx @ Hmat
    PHBx = HBx[:, P]
    GPHBx = PHBx * G
    HGPHBx = GPHBx @ Hmat
    SHGPHBx = HGPHBx * S
    return (sqrt(1.0 / D) * SHGPHBx).reshape(x_shape)


if __name__ == "__main__":
    # Module config: query_dimensions = D (power of 2 for the Hadamard transform).
    N, L, H, D = 2, 8, 4, 32
    softmax_temp = 1.0 / sqrt(D)

    key = jax.random.PRNGKey(0)
    kx, kb, kg, ks, kp = jax.random.split(key, 5)

    # Deterministic "new_feature_map" parameters (host-side sampling):
    x = jax.random.normal(kx, (N, L, H, D), dtype=jnp.float32)
    B = jnp.where(jax.random.bernoulli(kb, 0.5, (D,)), 1.0, -1.0).astype(jnp.float32)  # +-1
    G = jax.random.normal(kg, (D,), dtype=jnp.float32)                                 # N(0,1)
    # chi(df=D) samples: norms of D-dim standard-normal vectors, scaled by 1/||G||.
    chi_samples = jnp.linalg.norm(jax.random.normal(ks, (D, D), dtype=jnp.float32), axis=-1)
    S = chi_samples / jnp.linalg.norm(G)
    P = jax.random.permutation(kp, D)                                                  # randperm

    out = fastfood_forward(x, B, G, S, P, softmax_temp)
    out = jax.block_until_ready(out)

    ref = fastfood_reference(x, B, G, S, P, softmax_temp)
    assert out.shape == x.shape

    _, used_bf16, _ = _chip_config()
    tol = 5e-2 if used_bf16 else 1e-4   # bf16 operand path (v5e) needs looser tolerance
    np.testing.assert_allclose(np.asarray(out), np.asarray(ref), rtol=tol, atol=tol)

    print("KERNEL_OK")
</pallas_src>

<mosaic_0001>
module attributes {stable_mosaic.version = 11 : i64} {
  func.func @kernel(%arg0: i32, %arg1: memref<8x128xf32, #tpu.memory_space<vmem>>, %arg2: memref<128x128xf32, #tpu.memory_space<vmem>>, %arg3: memref<8x128xf32, #tpu.memory_space<vmem>>) attributes {dimension_semantics = [#tpu.dimension_semantics<parallel>], iteration_bounds = array<i64: 2>, scalar_prefetch = 0 : i64, scratch_operands = 0 : i64, tpu.core_type = #tpu.core_type<tc>, window_params = [{transform_indices = @transform_0, window_bounds = array<i64: 8, 128>}, {pipeline_mode = #tpu.pipeline_mode<synchronous>, transform_indices = @transform_1, window_bounds = array<i64: 128, 128>}, {transform_indices = @transform_2, window_bounds = array<i64: 8, 128>}]} {
    %c0 = arith.constant 0 : index
    %c0_0 = arith.constant 0 : index
    %0 = vector.load %arg1[%c0, %c0_0] : memref<8x128xf32, #tpu.memory_space<vmem>>, vector<8x128xf32>
    %c0_1 = arith.constant 0 : index
    %c0_2 = arith.constant 0 : index
    %1 = vector.load %arg2[%c0_1, %c0_2] : memref<128x128xf32, #tpu.memory_space<vmem>>, vector<128x128xf32>
    %cst = arith.constant dense<0.000000e+00> : vector<8x128xf32>
    %2 = tpu.matmul %0, %1, %cst {dimension_numbers = #tpu.dot_dimension_numbers<[1], [0], [0], [1], [0, 0, 1, 1], [], []>} : vector<8x128xf32>, vector<128x128xf32>, vector<8x128xf32> -> vector<8x128xf32>
    %c0_3 = arith.constant 0 : index
    %c0_4 = arith.constant 0 : index
    %3 = vector.load %arg3[%c0_3, %c0_4] : memref<8x128xf32, #tpu.memory_space<vmem>>, vector<8x128xf32>
    tpu.vector_store %arg3[%c0_3, %c0_4], %2 {strides = array<i32>} : memref<8x128xf32, #tpu.memory_space<vmem>>, vector<8x128xf32>,
    return
  }
  func.func @transform_0(%arg0: i32) -> (i32, i32) {
    %c0_i32 = arith.constant 0 : i32
    %c0_i32_0 = arith.constant 0 : i32
    return %arg0, %c0_i32 : i32, i32
  }
  func.func @transform_1(%arg0: i32) -> (i32, i32) {
    %c0_i32 = arith.constant 0 : i32
    %c0_i32_0 = arith.constant 0 : i32
    %c0_i32_1 = arith.constant 0 : i32
    return %c0_i32, %c0_i32_0 : i32, i32
  }
  func.func @transform_2(%arg0: i32) -> (i32, i32) {
    %c0_i32 = arith.constant 0 : i32
    %c0_i32_0 = arith.constant 0 : i32
    return %arg0, %c0_i32 : i32, i32
  }
}

</mosaic_0001>

<llo_original>
// kernel: tpu_custom_call.1
$region0: #{tpu_custom_call.1}
  #allocation0 [shape = 'u32[]', space=smem, size = 0x4, offset = 0x4, fixed_abs, tag = 'smem constant byte address 0x4 - core index']
  #allocation1 [shape = 'u32[72,128]{1,0:T(1,128)}', space=vmem, size = 0x9000, scoped, tag = 'internal scratch']
  %s0 = inlined_call_operand.hbm [shape: f32[16,128], index: 0, kind: input, shape index: {}]
  %s1 = inlined_call_operand.hbm [shape: f32[128,128], index: 1, kind: input, shape index: {}]
  %s2 = inlined_call_operand.hbm [shape: f32[16,128], index: 2, kind: output, shape index: {}]
  %s3 = sld [smem:[#allocation0]]
  $region49: #{tpu_custom_call.1} parent=0
    _
  %s5 = ssub.s32 1, %s3
  %s6 = scalar_select 0, %s5, %s3
  $region1: #{tpu_custom_call.1} parent=0
    #allocation2 [shape = 'u8[8192]{0}', space=vmem, size = 0x2000, scoped, tag = 'input window, operand 0']
    #allocation3 [shape = 's32[2]{0}', space=sflag, size = 0x8, scoped, tag = 'scoped memory for tpu_custom_call.1']
    #allocation4 [shape = 's32[2]{0}', space=sflag, size = 0x8, scoped, tag = 'scoped memory for tpu_custom_call.1']
    #allocation5 [shape = 'u8[65536]{0}', space=vmem, size = 0x10000, scoped, tag = 'input window, operand 1, single buffered']
    #allocation6 [shape = 's32[1]{0}', space=sflag, size = 0x4, scoped, tag = 'scoped memory for tpu_custom_call.1']
    #allocation7 [shape = 'u8[8192]{0}', space=vmem, size = 0x2000, scoped, tag = 'output window, operand 0']
    %7 = vsyncpa [#allocation3], 0
    %s8 = scalar_lea.sflag [#allocation3], 1
    %9 = vsyncpa %s8, 0
    %10 = vsyncpa [#allocation6], 0
    %11 = vsyncpa [#allocation4], 0
    %s12 = scalar_lea.sflag [#allocation4], 1
    %13 = vsyncpa %s12, 0
    loop: start=0, step=1, limit=4
    $region2: #{tpu_custom_call.1} parent=1 // loop_pre_header
      _
    $region3: #{tpu_custom_call.1} parent=1 // loop_header
      %s15 = sphi 0, %s19
      %p16 = scmp.ge.s32.totalorder %s15, 4
      %s25 = sphi 0, %s27
      %s28 = sphi 0, %s25
      %s29 = sphi 0, %s28
      %s45 = sphi 0, %s29
      %s49 = sphi 0, %s49
      %s51 = sphi 0, %s49
      %s52 = sphi 0, %s51
      %s66 = sphi 0, %s52
      %s72 = sphi 0, %s74
      %s75 = sphi 0, %s72
      %s76 = sphi 0, %s75
      %s92 = sphi 0, %s76
    $region4: #{tpu_custom_call.1} parent=1 // loop_header_branch
      %18 = sbr.rel (%p16) target = $region8
    $region5: #{tpu_custom_call.1} parent=1 // loop_body
      %s20 = ssub.s32 %s15, 1
      %s21 = ssub.s32 %s15, 2
      %s22 = sadd.s32 %s15, 1
      %s23 = ssub.s32 %s15, %s22
      %p24 = scmp.eq.s32.totalorder %s23, 0
      %s26 = sadd.s32 %s25, 1
      %s27 = scalar_select %p24, %s25, %s26
      %p30 = pneg %p24
      %p31 = scmp.eq.s32.totalorder %s15, 1
      %p32 = por %p30, %p31
      %p33 = scmp.ne.s32.totalorder %s25, %s28
      %p34 = scmp.eq.s32.totalorder %s15, 0
      %p35 = por %p33, %p34
      %p36 = scmp.ne.s32.totalorder %s25, %s28
      %p37 = scmp.eq.s32.totalorder %s20, 1
      %p38 = por %p36, %p37
      %p39 = scmp.ne.s32.totalorder %s28, %s29
      %p40 = scmp.eq.s32.totalorder %s20, 0
      %p41 = por %p39, %p40
      %p42 = scmp.ne.s32.totalorder %s28, %s29
      %p43 = scmp.eq.s32.totalorder %s21, 1
      %p44 = por %p42, %p43
      %p46 = scmp.ne.s32.totalorder %s29, %s45
      %p47 = scmp.eq.s32.totalorder %s21, 0
      %p48 = por %p46, %p47
      %s50 = sadd.s32 %s49, 1
      %p53 = scmp.eq.s32.totalorder %s15, 1
      %p54 = scmp.ne.s32.totalorder %s49, %s51
      %p55 = scmp.eq.s32.totalorder %s15, 0
      %p56 = por %p54, %p55
      %p57 = scmp.ne.s32.totalorder %s49, %s51
      %p58 = scmp.eq.s32.totalorder %s20, 1
      %p59 = por %p57, %p58
      %p60 = scmp.ne.s32.totalorder %s51, %s52
      %p61 = scmp.eq.s32.totalorder %s20, 0
      %p62 = por %p60, %p61
      %p63 = scmp.ne.s32.totalorder %s51, %s52
      %p64 = scmp.eq.s32.totalorder %s21, 1
      %p65 = por %p63, %p64
      %p67 = scmp.ne.s32.totalorder %s52, %s66
      %p68 = scmp.eq.s32.totalorder %s21, 0
      %p69 = por %p67, %p68
      %s70 = ssub.s32 %s15, %s22
      %p71 = scmp.eq.s32.totalorder %s70, 0
      %s73 = sadd.s32 %s72, 1
      %s74 = scalar_select %p71, %s72, %s73
      %p77 = pneg %p71
      %p78 = scmp.eq.s32.totalorder %s15, 1
      %p79 = por %p77, %p78
      %p80 = scmp.ne.s32.totalorder %s72, %s75
      %p81 = scmp.eq.s32.totalorder %s15, 0
      %p82 = por %p80, %p81
      %p83 = scmp.ne.s32.totalorder %s72, %s75
      %p84 = scmp.eq.s32.totalorder %s20, 1
      %p85 = por %p83, %p84
      %p86 = scmp.ne.s32.totalorder %s75, %s76
      %p87 = scmp.eq.s32.totalorder %s20, 0
      %p88 = por %p86, %p87
      %p89 = scmp.ne.s32.totalorder %s75, %s76
      %p90 = scmp.eq.s32.totalorder %s21, 1
      %p91 = por %p89, %p90
      %p93 = scmp.ne.s32.totalorder %s76, %s92
      %p94 = scmp.eq.s32.totalorder %s21, 0
      %p95 = por %p93, %p94
      %p96 = scmp.le.s32.totalorder 1, %s15
      %p97 = scmp.lt.s32.totalorder %s15, 3
      %p98 = pnand %p96, %p97
      %p99 = pneg %p98
      // Predicated region
      $region9: #{tpu_custom_call.1} parent=5 // pred_check
        _
      $region10: #{tpu_custom_call.1} parent=5 // pred_check_branch
        %101 = sbr.rel (%p98) target = $region12
      $region11: #{tpu_custom_call.1} parent=5 // pred_region
        %s102 = ssub.s32 %s15, 1
        // Predicated region
        $region13: #{tpu_custom_call.1} parent=11 // pred_check
          %p103 = pneg %p62
        $region14: #{tpu_custom_call.1} parent=11 // pred_check_branch
          %105 = sbr.rel (%p103) target = $region16
        $region15: #{tpu_custom_call.1} parent=11 // pred_region
          %107 = vsyncadd [#allocation6], 0
          %s108 = sshll.u32 %s1, 4
          %s109 = int_to_ptr.hbm [resolvable:$true] %s108
          %s110 = sshll.u32 [#allocation5], 4
          %s111 = int_to_ptr.vmem [resolvable:$true] %s110
          %116 = dma.hbm_to_vmem [thread:$0]  %s109, 2048, %s111, [#allocation6], 128, 128, 8
        $region16: #{tpu_custom_call.1} parent=11 // pred_fallthru
          _
      $region12: #{tpu_custom_call.1} parent=5 // pred_fallthru
        _
      %p117 = scmp.lt.s32.totalorder %s15, 2
      // Predicated region
      $region17: #{tpu_custom_call.1} parent=5 // pred_check
        %p118 = pneg %p117
      $region18: #{tpu_custom_call.1} parent=5 // pred_check_branch
        %120 = sbr.rel (%p118) target = $region20
      $region19: #{tpu_custom_call.1} parent=5 // pred_region
        // Predicated region
        $region21: #{tpu_custom_call.1} parent=19 // pred_check
          %p121 = pneg %p35
        $region22: #{tpu_custom_call.1} parent=19 // pred_check_branch
          %123 = sbr.rel (%p121) target = $region24
        $region23: #{tpu_custom_call.1} parent=19 // pred_region
          %s124 = sand.u32 %s25, 1
          %s125 = scalar_lea.sflag [#allocation3], %s124
          %s126 = sand.u32 %s25, 1
          %s127 = smul.addr %s126, 8
          %s128 = scalar_lea.vmem [#allocation2], %s127
          %130 = vsyncadd %s125, 0
          %s131 = smul.addr %s15, 8
          %s132 = scalar_lea.hbm %s0, %s131
          %s134 = sshll.u32 %s132, 4
          %s135 = int_to_ptr.hbm [resolvable:$true] %s134
          %s136 = sshll.u32 %s128, 4
          %s137 = int_to_ptr.vmem [resolvable:$true] %s136
          %139 = dma.hbm_to_vmem [thread:$0]  %s135, 128, %s137, %s125
        $region24: #{tpu_custom_call.1} parent=19 // pred_fallthru
          _
      $region20: #{tpu_custom_call.1} parent=5 // pred_fallthru
        _
      %p140 = scmp.le.s32.totalorder 1, %s15
      %p141 = scmp.lt.s32.totalorder %s15, 3
      %p142 = pnand %p140, %p141
      %p143 = pneg %p142
      // Predicated region
      $region25: #{tpu_custom_call.1} parent=5 // pred_check
        _
      $region26: #{tpu_custom_call.1} parent=5 // pred_check_branch
        %145 = sbr.rel (%p142) target = $region28
      $region27: #{tpu_custom_call.1} parent=5 // pred_region
        %s146 = ssub.s32 %s15, 1
        %s147 = sand.u32 %s28, 1
        %s148 = scalar_lea.sflag [#allocation3], %s147
        %s149 = sand.u32 %s28, 1
        %s150 = smul.addr %s149, 8
        %s151 = scalar_lea.vmem [#allocation2], %s150
        // Predicated region
        $region29: #{tpu_custom_call.1} parent=27 // pred_check
          %p152 = pneg %p41
        $region30: #{tpu_custom_call.1} parent=27 // pred_check_branch
          %154 = sbr.rel (%p152) target = $region32
        $region31: #{tpu_custom_call.1} parent=27 // pred_region
          %156 = dma.done %s148, 128
        $region32: #{tpu_custom_call.1} parent=27 // pred_fallthru
          _
        // Predicated region
        $region33: #{tpu_custom_call.1} parent=27 // pred_check
          %p157 = pneg %p62
        $region34: #{tpu_custom_call.1} parent=27 // pred_check_branch
          %159 = sbr.rel (%p157) target = $region36
        $region35: #{tpu_custom_call.1} parent=27 // pred_region
          %161 = dma.done [#allocation6], 2048
        $region36: #{tpu_custom_call.1} parent=27 // pred_fallthru
          _
        %s162 = sand.u32 %s28, 1
        %s163 = scalar_lea.sflag [#allocation3], %s162
        %s164 = sand.u32 %s28, 1
        %s165 = smul.addr %s164, 8
        %s166 = scalar_lea.vmem [#allocation2], %s165
        %p167 = pneg %p41
        %p168 = pneg %p38
        %p169 = pneg %p62
        %p170 = pneg %p59
        %p171 = pneg %p88
        %p172 = pneg %p85
        %s173 = sand.u32 %s75, 1
        %s174 = scalar_lea.sflag [#allocation4], %s173
        %s175 = sand.u32 %s75, 1
        %s176 = smul.addr %s175, 8
        %s177 = scalar_lea.vmem [#allocation7], %s176
        %v178 = vld [vmem:[%s151] sm:$0xff]
        %v179 = vld [vmem:[#allocation5] sm:$0xff]
        %v180 = vld [vmem:[#allocation5 + $0x8] sm:$0xff]
        %v181 = vld [vmem:[#allocation5 + $0x10] sm:$0xff]
        %v182 = vld [vmem:[#allocation5 + $0x18] sm:$0xff]
        %v183 = vld [vmem:[#allocation5 + $0x20] sm:$0xff]
        %v184 = vld [vmem:[#allocation5 + $0x28] sm:$0xff]
        %v185 = vld [vmem:[#allocation5 + $0x30] sm:$0xff]
        %v186 = vld [vmem:[#allocation5 + $0x38] sm:$0xff]
        %v187 = vld [vmem:[#allocation5 + $0x40] sm:$0xff]
        %v188 = vld [vmem:[#allocation5 + $0x48] sm:$0xff]
        %v189 = vld [vmem:[#allocation5 + $0x50] sm:$0xff]
        %v190 = vld [vmem:[#allocation5 + $0x58] sm:$0xff]
        %v191 = vld [vmem:[#allocation5 + $0x60] sm:$0xff]
        %v192 = vld [vmem:[#allocation5 + $0x68] sm:$0xff]
        %v193 = vld [vmem:[#allocation5 + $0x70] sm:$0xff]
        %v194 = vld [vmem:[#allocation5 + $0x78] sm:$0xff]
        %195 = vmatpush.msra.mxu0 %v194
        %196 = vmatpush.msra.mxu0 %v193
        %197 = vmatpush.msra.mxu0 %v192
        %198 = vmatpush.msra.mxu0 %v191
        %199 = vmatpush.msra.mxu0 %v190
        %200 = vmatpush.msra.mxu0 %v189
        %201 = vmatpush.msra.mxu0 %v188
        %202 = vmatpush.msra.mxu0 %v187
        %203 = vmatpush.msra.mxu0 %v186
        %204 = vmatpush.msra.mxu0 %v185
        %205 = vmatpush.msra.mxu0 %v184
        %206 = vmatpush.msra.mxu0 %v183
        %207 = vmatpush.msra.mxu0 %v182
        %208 = vmatpush.msra.mxu0 %v181
        %209 = vmatpush.msra.mxu0 %v180
        %210 = vmatpush.msra.mxu0 %v179
        %211 = vmatmul.f32.gmra.mxu0 %v178
        %v212 = vpop.f32.mrf.mxu0
        %v213 = vadd.f32 0.0, %v212
        %214 = vdwg.mxu0
        %215 = vst [vmem:[%s177] sm:$0xff] %v213
        %s216 = sand.u32 %s75, 1
        %s217 = scalar_lea.sflag [#allocation4], %s216
        %s218 = sand.u32 %s75, 1
        %s219 = smul.addr %s218, 8
        %s220 = scalar_lea.vmem [#allocation7], %s219
        // Predicated region
        $region37: #{tpu_custom_call.1} parent=27 // pred_check
          %p221 = pneg %p85
        $region38: #{tpu_custom_call.1} parent=27 // pred_check_branch
          %223 = sbr.rel (%p221) target = $region40
        $region39: #{tpu_custom_call.1} parent=27 // pred_region
          %225 = vsyncadd %s217, 0
          %s226 = smul.addr %s20, 8
          %s227 = scalar_lea.hbm %s2, %s226
          %s229 = sshll.u32 %s220, 4
          %s230 = int_to_ptr.vmem [resolvable:$true] %s229
          %s231 = sshll.u32 %s227, 4
          %s232 = int_to_ptr.hbm [resolvable:$true] %s231
          %234 = dma.vmem_to_hbm [thread:$0]  %s230, 128, %s232, %s217
        $region40: #{tpu_custom_call.1} parent=27 // pred_fallthru
          _
      $region28: #{tpu_custom_call.1} parent=5 // pred_fallthru
        _
      %p235 = scmp.le.s32.totalorder 2, %s15
      // Predicated region
      $region41: #{tpu_custom_call.1} parent=5 // pred_check
        %p236 = pneg %p235
      $region42: #{tpu_custom_call.1} parent=5 // pred_check_branch
        %238 = sbr.rel (%p236) target = $region44
      $region43: #{tpu_custom_call.1} parent=5 // pred_region
        %s239 = ssub.s32 %s15, 2
        // Predicated region
        $region45: #{tpu_custom_call.1} parent=43 // pred_check
          %p240 = pneg %p91
        $region46: #{tpu_custom_call.1} parent=43 // pred_check_branch
          %242 = sbr.rel (%p240) target = $region48
        $region47: #{tpu_custom_call.1} parent=43 // pred_region
          %s243 = sand.u32 %s76, 1
          %s244 = scalar_lea.sflag [#allocation4], %s243
          %s245 = sand.u32 %s76, 1
          %s246 = smul.addr %s245, 8
          %s247 = scalar_lea.vmem [#allocation7], %s246
          %249 = dma.done %s244, 128
        $region48: #{tpu_custom_call.1} parent=43 // pred_fallthru
          _
      $region44: #{tpu_custom_call.1} parent=5 // pred_fallthru
        _
    $region6: #{tpu_custom_call.1} parent=1 // loop_footer
      %s19 = sadd.s32 1, %s15
    $region7: #{tpu_custom_call.1} parent=1 // loop_footer_branch
      %14 = sbr.rel target = $region3
    $region8: #{tpu_custom_call.1} parent=1 // loop_exit
      _
    %250 = vsyncpa [#allocation3], 1
    %s251 = scalar_lea.sflag [#allocation3], 1
    %252 = vsyncpa %s251, 1
    %253 = vsyncpa [#allocation6], 1
    %254 = vsyncpa [#allocation4], 1
    %s255 = scalar_lea.sflag [#allocation4], 1
    %256 = vsyncpa %s255, 1

</llo_original>
